<compile_context>
chip_gen: v6e
topology: v6e:2x2x1
jax: 0.10.0
libtpu: 0.0.40
codegen_flags: <defaults>
</compile_context>

<pallas_src>
import numpy as np
import jax
import jax.numpy as jnp
from jax.experimental import pallas as pl
from jax.experimental.pallas import tpu as pltpu


def _round_up(x: int, m: int) -> int:
    return (x + m - 1) // m * m


def embedding_gather_kernel(idx_ref, tbl_ref, o_ref):
    # idx_ref : (TN, 1)  int32 token ids, tokens on sublanes
    # tbl_ref : (R, D)   embedding table, fully VMEM-resident
    # o_ref   : (TN, D)  lane/sublane-dense output slab
    idx = idx_ref[...]                       # (TN, 1)
    num_rows = tbl_ref.shape[0]              # static (small)
    acc = jnp.zeros(o_ref.shape, o_ref.dtype)
    # Exact gather: for each table row, select it into the rows of the output
    # slab whose token id matches.  Statically unrolled; only selects, so the
    # result is bit-identical to params[input].
    for r in range(num_rows):
        acc = jnp.where(idx == r, tbl_ref[r:r + 1, :], acc)
    o_ref[...] = acc


def learnable_embedding(t, params, *, tokens_per_tile: int = 256):
    """t: int array (any shape); params: (num_embeddings, *embedding_dim).
    Returns params[t] with shape t.shape + embedding_dim."""
    num_emb = params.shape[0]
    emb_shape = params.shape[1:]
    D = int(np.prod(emb_shape)) if emb_shape else 1
    table = params.reshape(num_emb, D)       # D on the lane (last) axis

    idx = jnp.asarray(t, jnp.int32).reshape(-1)
    N = idx.shape[0]

    # Tile the token axis; TN is a multiple of 8 (sublane-dense output).
    TN = min(tokens_per_tile, _round_up(N, 8))
    N_pad = _round_up(N, TN)
    num_tiles = N_pad // TN

    # Pad with index 0 (row 0 is always valid; padded rows are sliced off) and
    # lay token ids out as (N_pad, 1) so they sit on sublanes in the kernel.
    idx_col = jnp.zeros((N_pad, 1), jnp.int32).at[:N, 0].set(idx)

    out = pl.pallas_call(
        embedding_gather_kernel,
        out_shape=jax.ShapeDtypeStruct((N_pad, D), params.dtype),
        grid=(num_tiles,),
        in_specs=[
            # token-id tile for this grid step
            pl.BlockSpec((TN, 1), lambda i: (i, 0)),
            # whole embedding table, resident in VMEM (same block every step)
            pl.BlockSpec((num_emb, D), lambda i: (0, 0)),
        ],
        out_specs=pl.BlockSpec((TN, D), lambda i: (i, 0)),
        compiler_params=pltpu.CompilerParams(
            dimension_semantics=("parallel",)
        ),
    )(idx_col, table)

    return out[:N].reshape(*t.shape, *emb_shape)


if __name__ == "__main__":
    # Module hyper-parameters (synthetic, deterministic, small).
    num_embeddings = 16
    embedding_dim = (8, 16)          # *embedding_dim; flattens to D=128 (lane-aligned)

    key = jax.random.PRNGKey(0)
    k_params, k_idx = jax.random.split(key)

    # nn.Parameter(torch.randn(num_embeddings, *embedding_dim))
    params = jax.random.normal(
        k_params, (num_embeddings, *embedding_dim), dtype=jnp.float32
    )

    # Input indices (batch=2, seq=8), values in [0, num_embeddings).
    t = jax.random.randint(k_idx, (2, 8), 0, num_embeddings, dtype=jnp.int32)

    out = learnable_embedding(t, params)
    out = jax.block_until_ready(out)

    # Pure-JAX reference of the PyTorch forward: params[input].
    ref = params[t]
    np.testing.assert_allclose(np.asarray(out), np.asarray(ref), rtol=1e-6, atol=1e-6)

    print("KERNEL_OK")
</pallas_src>

<mosaic_0001>
module attributes {stable_mosaic.version = 11 : i64} {
  func.func @embedding_gather_kernel(%arg0: i32, %arg1: memref<16x1xi32, #tpu.memory_space<vmem>>, %arg2: memref<16x128xf32, #tpu.memory_space<vmem>>, %arg3: memref<16x128xf32, #tpu.memory_space<vmem>>) attributes {dimension_semantics = [#tpu.dimension_semantics<parallel>], iteration_bounds = array<i64: 1>, scalar_prefetch = 0 : i64, scratch_operands = 0 : i64, tpu.core_type = #tpu.core_type<tc>, window_params = [{transform_indices = @transform_0, window_bounds = array<i64: 16, 1>}, {pipeline_mode = #tpu.pipeline_mode<synchronous>, transform_indices = @transform_1, window_bounds = array<i64: 16, 128>}, {transform_indices = @transform_2, window_bounds = array<i64: 16, 128>}]} {
    %c0 = arith.constant 0 : index
    %c0_0 = arith.constant 0 : index
    %0 = vector.load %arg1[%c0, %c0_0] : memref<16x1xi32, #tpu.memory_space<vmem>>, vector<16x1xi32>
    %cst = arith.constant 0.000000e+00 : f32
    %1 = vector.broadcast %cst : f32 to vector<16x128xf32>
    %c0_i32 = arith.constant 0 : i32
    %2 = vector.broadcast %c0_i32 : i32 to vector<16x1xi32>
    %3 = arith.cmpi eq, %0, %2 : vector<16x1xi32>
    %c0_1 = arith.constant 0 : index
    %c0_2 = arith.constant 0 : index
    %4 = vector.load %arg2[%c0_1, %c0_2] : memref<16x128xf32, #tpu.memory_space<vmem>>, vector<1x128xf32>
    %5 = vector.shape_cast %3 : vector<16x1xi1> to vector<16x1xi1>
    %6 = vector.broadcast %5 : vector<16x1xi1> to vector<16x128xi1>
    %7 = vector.shape_cast %4 : vector<1x128xf32> to vector<1x128xf32>
    %8 = vector.broadcast %7 : vector<1x128xf32> to vector<16x128xf32>
    %9 = arith.select %6, %8, %1 : vector<16x128xi1>, vector<16x128xf32>
    %c1_i32 = arith.constant 1 : i32
    %10 = vector.broadcast %c1_i32 : i32 to vector<16x1xi32>
    %11 = arith.cmpi eq, %0, %10 : vector<16x1xi32>
    %c1 = arith.constant 1 : index
    %c0_3 = arith.constant 0 : index
    %12 = vector.load %arg2[%c1, %c0_3] : memref<16x128xf32, #tpu.memory_space<vmem>>, vector<1x128xf32>
    %13 = vector.shape_cast %11 : vector<16x1xi1> to vector<16x1xi1>
    %14 = vector.broadcast %13 : vector<16x1xi1> to vector<16x128xi1>
    %15 = vector.shape_cast %12 : vector<1x128xf32> to vector<1x128xf32>
    %16 = vector.broadcast %15 : vector<1x128xf32> to vector<16x128xf32>
    %17 = arith.select %14, %16, %9 : vector<16x128xi1>, vector<16x128xf32>
    %c2_i32 = arith.constant 2 : i32
    %18 = vector.broadcast %c2_i32 : i32 to vector<16x1xi32>
    %19 = arith.cmpi eq, %0, %18 : vector<16x1xi32>
    %c2 = arith.constant 2 : index
    %c0_4 = arith.constant 0 : index
    %20 = vector.load %arg2[%c2, %c0_4] : memref<16x128xf32, #tpu.memory_space<vmem>>, vector<1x128xf32>
    %21 = vector.shape_cast %19 : vector<16x1xi1> to vector<16x1xi1>
    %22 = vector.broadcast %21 : vector<16x1xi1> to vector<16x128xi1>
    %23 = vector.shape_cast %20 : vector<1x128xf32> to vector<1x128xf32>
    %24 = vector.broadcast %23 : vector<1x128xf32> to vector<16x128xf32>
    %25 = arith.select %22, %24, %17 : vector<16x128xi1>, vector<16x128xf32>
    %c3_i32 = arith.constant 3 : i32
    %26 = vector.broadcast %c3_i32 : i32 to vector<16x1xi32>
    %27 = arith.cmpi eq, %0, %26 : vector<16x1xi32>
    %c3 = arith.constant 3 : index
    %c0_5 = arith.constant 0 : index
    %28 = vector.load %arg2[%c3, %c0_5] : memref<16x128xf32, #tpu.memory_space<vmem>>, vector<1x128xf32>
    %29 = vector.shape_cast %27 : vector<16x1xi1> to vector<16x1xi1>
    %30 = vector.broadcast %29 : vector<16x1xi1> to vector<16x128xi1>
    %31 = vector.shape_cast %28 : vector<1x128xf32> to vector<1x128xf32>
    %32 = vector.broadcast %31 : vector<1x128xf32> to vector<16x128xf32>
    %33 = arith.select %30, %32, %25 : vector<16x128xi1>, vector<16x128xf32>
    %c4_i32 = arith.constant 4 : i32
    %34 = vector.broadcast %c4_i32 : i32 to vector<16x1xi32>
    %35 = arith.cmpi eq, %0, %34 : vector<16x1xi32>
    %c4 = arith.constant 4 : index
    %c0_6 = arith.constant 0 : index
    %36 = vector.load %arg2[%c4, %c0_6] : memref<16x128xf32, #tpu.memory_space<vmem>>, vector<1x128xf32>
    %37 = vector.shape_cast %35 : vector<16x1xi1> to vector<16x1xi1>
    %38 = vector.broadcast %37 : vector<16x1xi1> to vector<16x128xi1>
    %39 = vector.shape_cast %36 : vector<1x128xf32> to vector<1x128xf32>
    %40 = vector.broadcast %39 : vector<1x128xf32> to vector<16x128xf32>
    %41 = arith.select %38, %40, %33 : vector<16x128xi1>, vector<16x128xf32>
    %c5_i32 = arith.constant 5 : i32
    %42 = vector.broadcast %c5_i32 : i32 to vector<16x1xi32>
    %43 = arith.cmpi eq, %0, %42 : vector<16x1xi32>
    %c5 = arith.constant 5 : index
    %c0_7 = arith.constant 0 : index
    %44 = vector.load %arg2[%c5, %c0_7] : memref<16x128xf32, #tpu.memory_space<vmem>>, vector<1x128xf32>
    %45 = vector.shape_cast %43 : vector<16x1xi1> to vector<16x1xi1>
    %46 = vector.broadcast %45 : vector<16x1xi1> to vector<16x128xi1>
    %47 = vector.shape_cast %44 : vector<1x128xf32> to vector<1x128xf32>
    %48 = vector.broadcast %47 : vector<1x128xf32> to vector<16x128xf32>
    %49 = arith.select %46, %48, %41 : vector<16x128xi1>, vector<16x128xf32>
    %c6_i32 = arith.constant 6 : i32
    %50 = vector.broadcast %c6_i32 : i32 to vector<16x1xi32>
    %51 = arith.cmpi eq, %0, %50 : vector<16x1xi32>
    %c6 = arith.constant 6 : index
    %c0_8 = arith.constant 0 : index
    %52 = vector.load %arg2[%c6, %c0_8] : memref<16x128xf32, #tpu.memory_space<vmem>>, vector<1x128xf32>
    %53 = vector.shape_cast %51 : vector<16x1xi1> to vector<16x1xi1>
    %54 = vector.broadcast %53 : vector<16x1xi1> to vector<16x128xi1>
    %55 = vector.shape_cast %52 : vector<1x128xf32> to vector<1x128xf32>
    %56 = vector.broadcast %55 : vector<1x128xf32> to vector<16x128xf32>
    %57 = arith.select %54, %56, %49 : vector<16x128xi1>, vector<16x128xf32>
    %c7_i32 = arith.constant 7 : i32
    %58 = vector.broadcast %c7_i32 : i32 to vector<16x1xi32>
    %59 = arith.cmpi eq, %0, %58 : vector<16x1xi32>
    %c7 = arith.constant 7 : index
    %c0_9 = arith.constant 0 : index
    %60 = vector.load %arg2[%c7, %c0_9] : memref<16x128xf32, #tpu.memory_space<vmem>>, vector<1x128xf32>
    %61 = vector.shape_cast %59 : vector<16x1xi1> to vector<16x1xi1>
    %62 = vector.broadcast %61 : vector<16x1xi1> to vector<16x128xi1>
    %63 = vector.shape_cast %60 : vector<1x128xf32> to vector<1x128xf32>
    %64 = vector.broadcast %63 : vector<1x128xf32> to vector<16x128xf32>
    %65 = arith.select %62, %64, %57 : vector<16x128xi1>, vector<16x128xf32>
    %c8_i32 = arith.constant 8 : i32
    %66 = vector.broadcast %c8_i32 : i32 to vector<16x1xi32>
    %67 = arith.cmpi eq, %0, %66 : vector<16x1xi32>
    %c8 = arith.constant 8 : index
    %c0_10 = arith.constant 0 : index
    %68 = vector.load %arg2[%c8, %c0_10] : memref<16x128xf32, #tpu.memory_space<vmem>>, vector<1x128xf32>
    %69 = vector.shape_cast %67 : vector<16x1xi1> to vector<16x1xi1>
    %70 = vector.broadcast %69 : vector<16x1xi1> to vector<16x128xi1>
    %71 = vector.shape_cast %68 : vector<1x128xf32> to vector<1x128xf32>
    %72 = vector.broadcast %71 : vector<1x128xf32> to vector<16x128xf32>
    %73 = arith.select %70, %72, %65 : vector<16x128xi1>, vector<16x128xf32>
    %c9_i32 = arith.constant 9 : i32
    %74 = vector.broadcast %c9_i32 : i32 to vector<16x1xi32>
    %75 = arith.cmpi eq, %0, %74 : vector<16x1xi32>
    %c9 = arith.constant 9 : index
    %c0_11 = arith.constant 0 : index
    %76 = vector.load %arg2[%c9, %c0_11] : memref<16x128xf32, #tpu.memory_space<vmem>>, vector<1x128xf32>
    %77 = vector.shape_cast %75 : vector<16x1xi1> to vector<16x1xi1>
    %78 = vector.broadcast %77 : vector<16x1xi1> to vector<16x128xi1>
    %79 = vector.shape_cast %76 : vector<1x128xf32> to vector<1x128xf32>
    %80 = vector.broadcast %79 : vector<1x128xf32> to vector<16x128xf32>
    %81 = arith.select %78, %80, %73 : vector<16x128xi1>, vector<16x128xf32>
    %c10_i32 = arith.constant 10 : i32
    %82 = vector.broadcast %c10_i32 : i32 to vector<16x1xi32>
    %83 = arith.cmpi eq, %0, %82 : vector<16x1xi32>
    %c10 = arith.constant 10 : index
    %c0_12 = arith.constant 0 : index
    %84 = vector.load %arg2[%c10, %c0_12] : memref<16x128xf32, #tpu.memory_space<vmem>>, vector<1x128xf32>
    %85 = vector.shape_cast %83 : vector<16x1xi1> to vector<16x1xi1>
    %86 = vector.broadcast %85 : vector<16x1xi1> to vector<16x128xi1>
    %87 = vector.shape_cast %84 : vector<1x128xf32> to vector<1x128xf32>
    %88 = vector.broadcast %87 : vector<1x128xf32> to vector<16x128xf32>
    %89 = arith.select %86, %88, %81 : vector<16x128xi1>, vector<16x128xf32>
    %c11_i32 = arith.constant 11 : i32
    %90 = vector.broadcast %c11_i32 : i32 to vector<16x1xi32>
    %91 = arith.cmpi eq, %0, %90 : vector<16x1xi32>
    %c11 = arith.constant 11 : index
    %c0_13 = arith.constant 0 : index
    %92 = vector.load %arg2[%c11, %c0_13] : memref<16x128xf32, #tpu.memory_space<vmem>>, vector<1x128xf32>
    %93 = vector.shape_cast %91 : vector<16x1xi1> to vector<16x1xi1>
    %94 = vector.broadcast %93 : vector<16x1xi1> to vector<16x128xi1>
    %95 = vector.shape_cast %92 : vector<1x128xf32> to vector<1x128xf32>
    %96 = vector.broadcast %95 : vector<1x128xf32> to vector<16x128xf32>
    %97 = arith.select %94, %96, %89 : vector<16x128xi1>, vector<16x128xf32>
    %c12_i32 = arith.constant 12 : i32
    %98 = vector.broadcast %c12_i32 : i32 to vector<16x1xi32>
    %99 = arith.cmpi eq, %0, %98 : vector<16x1xi32>
    %c12 = arith.constant 12 : index
    %c0_14 = arith.constant 0 : index
    %100 = vector.load %arg2[%c12, %c0_14] : memref<16x128xf32, #tpu.memory_space<vmem>>, vector<1x128xf32>
    %101 = vector.shape_cast %99 : vector<16x1xi1> to vector<16x1xi1>
    %102 = vector.broadcast %101 : vector<16x1xi1> to vector<16x128xi1>
    %103 = vector.shape_cast %100 : vector<1x128xf32> to vector<1x128xf32>
    %104 = vector.broadcast %103 : vector<1x128xf32> to vector<16x128xf32>
    %105 = arith.select %102, %104, %97 : vector<16x128xi1>, vector<16x128xf32>
    %c13_i32 = arith.constant 13 : i32
    %106 = vector.broadcast %c13_i32 : i32 to vector<16x1xi32>
    %107 = arith.cmpi eq, %0, %106 : vector<16x1xi32>
    %c13 = arith.constant 13 : index
    %c0_15 = arith.constant 0 : index
    %108 = vector.load %arg2[%c13, %c0_15] : memref<16x128xf32, #tpu.memory_space<vmem>>, vector<1x128xf32>
    %109 = vector.shape_cast %107 : vector<16x1xi1> to vector<16x1xi1>
    %110 = vector.broadcast %109 : vector<16x1xi1> to vector<16x128xi1>
    %111 = vector.shape_cast %108 : vector<1x128xf32> to vector<1x128xf32>
    %112 = vector.broadcast %111 : vector<1x128xf32> to vector<16x128xf32>
    %113 = arith.select %110, %112, %105 : vector<16x128xi1>, vector<16x128xf32>
    %c14_i32 = arith.constant 14 : i32
    %114 = vector.broadcast %c14_i32 : i32 to vector<16x1xi32>
    %115 = arith.cmpi eq, %0, %114 : vector<16x1xi32>
    %c14 = arith.constant 14 : index
    %c0_16 = arith.constant 0 : index
    %116 = vector.load %arg2[%c14, %c0_16] : memref<16x128xf32, #tpu.memory_space<vmem>>, vector<1x128xf32>
    %117 = vector.shape_cast %115 : vector<16x1xi1> to vector<16x1xi1>
    %118 = vector.broadcast %117 : vector<16x1xi1> to vector<16x128xi1>
    %119 = vector.shape_cast %116 : vector<1x128xf32> to vector<1x128xf32>
    %120 = vector.broadcast %119 : vector<1x128xf32> to vector<16x128xf32>
    %121 = arith.select %118, %120, %113 : vector<16x128xi1>, vector<16x128xf32>
    %c15_i32 = arith.constant 15 : i32
    %122 = vector.broadcast %c15_i32 : i32 to vector<16x1xi32>
    %123 = arith.cmpi eq, %0, %122 : vector<16x1xi32>
    %c15 = arith.constant 15 : index
    %c0_17 = arith.constant 0 : index
    %124 = vector.load %arg2[%c15, %c0_17] : memref<16x128xf32, #tpu.memory_space<vmem>>, vector<1x128xf32>
    %125 = vector.shape_cast %123 : vector<16x1xi1> to vector<16x1xi1>
    %126 = vector.broadcast %125 : vector<16x1xi1> to vector<16x128xi1>
    %127 = vector.shape_cast %124 : vector<1x128xf32> to vector<1x128xf32>
    %128 = vector.broadcast %127 : vector<1x128xf32> to vector<16x128xf32>
    %129 = arith.select %126, %128, %121 : vector<16x128xi1>, vector<16x128xf32>
    %c0_18 = arith.constant 0 : index
    %c0_19 = arith.constant 0 : index
    %130 = vector.load %arg3[%c0_18, %c0_19] : memref<16x128xf32, #tpu.memory_space<vmem>>, vector<16x128xf32>
    tpu.vector_store %arg3[%c0_18, %c0_19], %129 {strides = array<i32>} : memref<16x128xf32, #tpu.memory_space<vmem>>, vector<16x128xf32>,
    return
  }
  func.func @transform_0(%arg0: i32) -> (i32, i32) {
    %c0_i32 = arith.constant 0 : i32
    %c0_i32_0 = arith.constant 0 : i32
    return %arg0, %c0_i32 : i32, i32
  }
  func.func @transform_1(%arg0: i32) -> (i32, i32) {
    %c0_i32 = arith.constant 0 : i32
    %c0_i32_0 = arith.constant 0 : i32
    %c0_i32_1 = arith.constant 0 : i32
    return %c0_i32, %c0_i32_0 : i32, i32
  }
  func.func @transform_2(%arg0: i32) -> (i32, i32) {
    %c0_i32 = arith.constant 0 : i32
    %c0_i32_0 = arith.constant 0 : i32
    return %arg0, %c0_i32 : i32, i32
  }
}

</mosaic_0001>

<llo_original>
// kernel: tpu_custom_call.1
$region0: #{tpu_custom_call.1}
  #allocation0 [shape = 'u32[]', space=smem, size = 0x4, offset = 0x4, fixed_abs, tag = 'smem constant byte address 0x4 - core index']
  #allocation1 [shape = 'u32[144,128]{1,0:T(1,128)}', space=vmem, size = 0x12000, scoped, tag = 'internal scratch']
  %s0 = inlined_call_operand.vmem [shape: s32[16,1], index: 0, kind: input, shape index: {}]
  %s1 = inlined_call_operand.vmem [shape: f32[16,128], index: 1, kind: input, shape index: {}]
  %s2 = inlined_call_operand.hbm [shape: f32[16,128], index: 2, kind: output, shape index: {}]
  %s3 = sld [smem:[#allocation0]]
  $region18: #{tpu_custom_call.1} parent=0
    _
  %s5 = ssub.s32 1, %s3
  %s6 = scalar_select 0, %s5, %s3
  $region1: #{tpu_custom_call.1} parent=0
    #allocation2 [shape = 'u8[8192]{0}', space=vmem, size = 0x2000, scoped, tag = 'output window, operand 0, single buffered']
    #allocation3 [shape = 's32[1]{0}', space=sflag, size = 0x4, scoped, tag = 'scoped memory for tpu_custom_call.1']
    %7 = vsyncpa [#allocation3], 0
    // Predicated region
    $region2: #{tpu_custom_call.1} parent=1 // pred_check
      _
    $region3: #{tpu_custom_call.1} parent=1 // pred_check_branch
      %9 = sbr.rel (0) target = $region5
    $region4: #{tpu_custom_call.1} parent=1 // pred_region
      _
    $region5: #{tpu_custom_call.1} parent=1 // pred_fallthru
      _
    // Predicated region
    $region6: #{tpu_custom_call.1} parent=1 // pred_check
      _
    $region7: #{tpu_custom_call.1} parent=1 // pred_check_branch
      %11 = sbr.rel (0) target = $region9
    $region8: #{tpu_custom_call.1} parent=1 // pred_region
      _
    $region9: #{tpu_custom_call.1} parent=1 // pred_fallthru
      _
    %v12 = vld [vmem:[%s0] sm:$0xff]
    %v13 = vld [vmem:[%s0 + $0x8] sm:$0xff]
    %vm14 = vcmp.eq.s32.totalorder %v12, 0
    %vm15 = vcmp.eq.s32.totalorder %v13, 0
    %v16 = vld [vmem:[%s1] sm:$0x1]
    %v17 = vsel %vm14, 1, 0
    %v18 = vsel %vm15, 1, 0
    %19 = vset.pattern.permute.xlu0 0
    %20 = vperm.xlu0 %19, %v17
    %v21 = vpop.permute.xlu0 %20
    %22 = vset.pattern.permute.xlu0 0
    %23 = vperm.xlu0 %22, %v18
    %v24 = vpop.permute.xlu0 %23
    %vm25 = vcmp.eq.s32.totalorder %v21, 1
    %vm26 = vcmp.eq.s32.totalorder %v24, 1
    %v27 = vlaneseq
    %v28 = vshrl.u32 %v27, 7
    %v29 = vsub.s32 0, %v28
    %v30 = vrot.slane %v16, %v29
    %v31 = vsel %vm25, %v30, 0.0
    %v32 = vsel %vm26, %v30, 0.0
    %vm33 = vcmp.eq.s32.totalorder %v12, 1
    %vm34 = vcmp.eq.s32.totalorder %v13, 1
    %v35 = vld [vmem:[%s1 + $0x1] sm:$0x1]
    %v36 = vsel %vm33, 1, 0
    %v37 = vsel %vm34, 1, 0
    %38 = vset.pattern.permute.xlu0 0
    %39 = vperm.xlu0 %38, %v36
    %v40 = vpop.permute.xlu0 %39
    %41 = vset.pattern.permute.xlu0 0
    %42 = vperm.xlu0 %41, %v37
    %v43 = vpop.permute.xlu0 %42
    %vm44 = vcmp.eq.s32.totalorder %v40, 1
    %vm45 = vcmp.eq.s32.totalorder %v43, 1
    %v46 = vlaneseq
    %v47 = vshrl.u32 %v46, 7
    %v48 = vsub.s32 0, %v47
    %v49 = vrot.slane %v35, %v48
    %v50 = vsel %vm44, %v49, %v31
    %v51 = vsel %vm45, %v49, %v32
    %vm52 = vcmp.eq.s32.totalorder %v12, 2
    %vm53 = vcmp.eq.s32.totalorder %v13, 2
    %v54 = vld [vmem:[%s1 + $0x2] sm:$0x1]
    %v55 = vsel %vm52, 1, 0
    %v56 = vsel %vm53, 1, 0
    %57 = vset.pattern.permute.xlu0 0
    %58 = vperm.xlu0 %57, %v55
    %v59 = vpop.permute.xlu0 %58
    %60 = vset.pattern.permute.xlu0 0
    %61 = vperm.xlu0 %60, %v56
    %v62 = vpop.permute.xlu0 %61
    %vm63 = vcmp.eq.s32.totalorder %v59, 1
    %vm64 = vcmp.eq.s32.totalorder %v62, 1
    %v65 = vlaneseq
    %v66 = vshrl.u32 %v65, 7
    %v67 = vsub.s32 0, %v66
    %v68 = vrot.slane %v54, %v67
    %v69 = vsel %vm63, %v68, %v50
    %v70 = vsel %vm64, %v68, %v51
    %vm71 = vcmp.eq.s32.totalorder %v12, 3
    %vm72 = vcmp.eq.s32.totalorder %v13, 3
    %v73 = vld [vmem:[%s1 + $0x3] sm:$0x1]
    %v74 = vsel %vm71, 1, 0
    %v75 = vsel %vm72, 1, 0
    %76 = vset.pattern.permute.xlu0 0
    %77 = vperm.xlu0 %76, %v74
    %v78 = vpop.permute.xlu0 %77
    %79 = vset.pattern.permute.xlu0 0
    %80 = vperm.xlu0 %79, %v75
    %v81 = vpop.permute.xlu0 %80
    %vm82 = vcmp.eq.s32.totalorder %v78, 1
    %vm83 = vcmp.eq.s32.totalorder %v81, 1
    %v84 = vlaneseq
    %v85 = vshrl.u32 %v84, 7
    %v86 = vsub.s32 0, %v85
    %v87 = vrot.slane %v73, %v86
    %v88 = vsel %vm82, %v87, %v69
    %v89 = vsel %vm83, %v87, %v70
    %vm90 = vcmp.eq.s32.totalorder %v12, 4
    %vm91 = vcmp.eq.s32.totalorder %v13, 4
    %v92 = vld [vmem:[%s1 + $0x4] sm:$0x1]
    %v93 = vsel %vm90, 1, 0
    %v94 = vsel %vm91, 1, 0
    %95 = vset.pattern.permute.xlu0 0
    %96 = vperm.xlu0 %95, %v93
    %v97 = vpop.permute.xlu0 %96
    %98 = vset.pattern.permute.xlu0 0
    %99 = vperm.xlu0 %98, %v94
    %v100 = vpop.permute.xlu0 %99
    %vm101 = vcmp.eq.s32.totalorder %v97, 1
    %vm102 = vcmp.eq.s32.totalorder %v100, 1
    %v103 = vlaneseq
    %v104 = vshrl.u32 %v103, 7
    %v105 = vsub.s32 0, %v104
    %v106 = vrot.slane %v92, %v105
    %v107 = vsel %vm101, %v106, %v88
    %v108 = vsel %vm102, %v106, %v89
    %vm109 = vcmp.eq.s32.totalorder %v12, 5
    %vm110 = vcmp.eq.s32.totalorder %v13, 5
    %v111 = vld [vmem:[%s1 + $0x5] sm:$0x1]
    %v112 = vsel %vm109, 1, 0
    %v113 = vsel %vm110, 1, 0
    %114 = vset.pattern.permute.xlu0 0
    %115 = vperm.xlu0 %114, %v112
    %v116 = vpop.permute.xlu0 %115
    %117 = vset.pattern.permute.xlu0 0
    %118 = vperm.xlu0 %117, %v113
    %v119 = vpop.permute.xlu0 %118
    %vm120 = vcmp.eq.s32.totalorder %v116, 1
    %vm121 = vcmp.eq.s32.totalorder %v119, 1
    %v122 = vlaneseq
    %v123 = vshrl.u32 %v122, 7
    %v124 = vsub.s32 0, %v123
    %v125 = vrot.slane %v111, %v124
    %v126 = vsel %vm120, %v125, %v107
    %v127 = vsel %vm121, %v125, %v108
    %vm128 = vcmp.eq.s32.totalorder %v12, 6
    %vm129 = vcmp.eq.s32.totalorder %v13, 6
    %v130 = vld [vmem:[%s1 + $0x6] sm:$0x1]
    %v131 = vsel %vm128, 1, 0
    %v132 = vsel %vm129, 1, 0
    %133 = vset.pattern.permute.xlu0 0
    %134 = vperm.xlu0 %133, %v131
    %v135 = vpop.permute.xlu0 %134
    %136 = vset.pattern.permute.xlu0 0
    %137 = vperm.xlu0 %136, %v132
    %v138 = vpop.permute.xlu0 %137
    %vm139 = vcmp.eq.s32.totalorder %v135, 1
    %vm140 = vcmp.eq.s32.totalorder %v138, 1
    %v141 = vlaneseq
    %v142 = vshrl.u32 %v141, 7
    %v143 = vsub.s32 0, %v142
    %v144 = vrot.slane %v130, %v143
    %v145 = vsel %vm139, %v144, %v126
    %v146 = vsel %vm140, %v144, %v127
    %vm147 = vcmp.eq.s32.totalorder %v12, 7
    %vm148 = vcmp.eq.s32.totalorder %v13, 7
    %v149 = vld [vmem:[%s1 + $0x7] sm:$0x1]
    %v150 = vsel %vm147, 1, 0
    %v151 = vsel %vm148, 1, 0
    %152 = vset.pattern.permute.xlu0 0
    %153 = vperm.xlu0 %152, %v150
    %v154 = vpop.permute.xlu0 %153
    %155 = vset.pattern.permute.xlu0 0
    %156 = vperm.xlu0 %155, %v151
    %v157 = vpop.permute.xlu0 %156
    %vm158 = vcmp.eq.s32.totalorder %v154, 1
    %vm159 = vcmp.eq.s32.totalorder %v157, 1
    %v160 = vlaneseq
    %v161 = vshrl.u32 %v160, 7
    %v162 = vsub.s32 0, %v161
    %v163 = vrot.slane %v149, %v162
    %v164 = vsel %vm158, %v163, %v145
    %v165 = vsel %vm159, %v163, %v146
    %vm166 = vcmp.eq.s32.totalorder %v12, 8
    %vm167 = vcmp.eq.s32.totalorder %v13, 8
    %v168 = vld [vmem:[%s1 + $0x8] sm:$0x1]
    %v169 = vsel %vm166, 1, 0
    %v170 = vsel %vm167, 1, 0
    %171 = vset.pattern.permute.xlu0 0
    %172 = vperm.xlu0 %171, %v169
    %v173 = vpop.permute.xlu0 %172
    %174 = vset.pattern.permute.xlu0 0
    %175 = vperm.xlu0 %174, %v170
    %v176 = vpop.permute.xlu0 %175
    %vm177 = vcmp.eq.s32.totalorder %v173, 1
    %vm178 = vcmp.eq.s32.totalorder %v176, 1
    %v179 = vlaneseq
    %v180 = vshrl.u32 %v179, 7
    %v181 = vsub.s32 0, %v180
    %v182 = vrot.slane %v168, %v181
    %v183 = vsel %vm177, %v182, %v164
    %v184 = vsel %vm178, %v182, %v165
    %vm185 = vcmp.eq.s32.totalorder %v12, 9
    %vm186 = vcmp.eq.s32.totalorder %v13, 9
    %v187 = vld [vmem:[%s1 + $0x9] sm:$0x1]
    %v188 = vsel %vm185, 1, 0
    %v189 = vsel %vm186, 1, 0
    %190 = vset.pattern.permute.xlu0 0
    %191 = vperm.xlu0 %190, %v188
    %v192 = vpop.permute.xlu0 %191
    %193 = vset.pattern.permute.xlu0 0
    %194 = vperm.xlu0 %193, %v189
    %v195 = vpop.permute.xlu0 %194
    %vm196 = vcmp.eq.s32.totalorder %v192, 1
    %vm197 = vcmp.eq.s32.totalorder %v195, 1
    %v198 = vlaneseq
    %v199 = vshrl.u32 %v198, 7
    %v200 = vsub.s32 0, %v199
    %v201 = vrot.slane %v187, %v200
    %v202 = vsel %vm196, %v201, %v183
    %v203 = vsel %vm197, %v201, %v184
    %vm204 = vcmp.eq.s32.totalorder %v12, 10
    %vm205 = vcmp.eq.s32.totalorder %v13, 10
    %v206 = vld [vmem:[%s1 + $0xa] sm:$0x1]
    %v207 = vsel %vm204, 1, 0
    %v208 = vsel %vm205, 1, 0
    %209 = vset.pattern.permute.xlu0 0
    %210 = vperm.xlu0 %209, %v207
    %v211 = vpop.permute.xlu0 %210
    %212 = vset.pattern.permute.xlu0 0
    %213 = vperm.xlu0 %212, %v208
    %v214 = vpop.permute.xlu0 %213
    %vm215 = vcmp.eq.s32.totalorder %v211, 1
    %vm216 = vcmp.eq.s32.totalorder %v214, 1
    %v217 = vlaneseq
    %v218 = vshrl.u32 %v217, 7
    %v219 = vsub.s32 0, %v218
    %v220 = vrot.slane %v206, %v219
    %v221 = vsel %vm215, %v220, %v202
    %v222 = vsel %vm216, %v220, %v203
    %vm223 = vcmp.eq.s32.totalorder %v12, 11
    %vm224 = vcmp.eq.s32.totalorder %v13, 11
    %v225 = vld [vmem:[%s1 + $0xb] sm:$0x1]
    %v226 = vsel %vm223, 1, 0
    %v227 = vsel %vm224, 1, 0
    %228 = vset.pattern.permute.xlu0 0
    %229 = vperm.xlu0 %228, %v226
    %v230 = vpop.permute.xlu0 %229
    %231 = vset.pattern.permute.xlu0 0
    %232 = vperm.xlu0 %231, %v227
    %v233 = vpop.permute.xlu0 %232
    %vm234 = vcmp.eq.s32.totalorder %v230, 1
    %vm235 = vcmp.eq.s32.totalorder %v233, 1
    %v236 = vlaneseq
    %v237 = vshrl.u32 %v236, 7
    %v238 = vsub.s32 0, %v237
    %v239 = vrot.slane %v225, %v238
    %v240 = vsel %vm234, %v239, %v221
    %v241 = vsel %vm235, %v239, %v222
    %vm242 = vcmp.eq.s32.totalorder %v12, 12
    %vm243 = vcmp.eq.s32.totalorder %v13, 12
    %v244 = vld [vmem:[%s1 + $0xc] sm:$0x1]
    %v245 = vsel %vm242, 1, 0
    %v246 = vsel %vm243, 1, 0
    %247 = vset.pattern.permute.xlu0 0
    %248 = vperm.xlu0 %247, %v245
    %v249 = vpop.permute.xlu0 %248
    %250 = vset.pattern.permute.xlu0 0
    %251 = vperm.xlu0 %250, %v246
    %v252 = vpop.permute.xlu0 %251
    %vm253 = vcmp.eq.s32.totalorder %v249, 1
    %vm254 = vcmp.eq.s32.totalorder %v252, 1
    %v255 = vlaneseq
    %v256 = vshrl.u32 %v255, 7
    %v257 = vsub.s32 0, %v256
    %v258 = vrot.slane %v244, %v257
    %v259 = vsel %vm253, %v258, %v240
    %v260 = vsel %vm254, %v258, %v241
    %vm261 = vcmp.eq.s32.totalorder %v12, 13
    %vm262 = vcmp.eq.s32.totalorder %v13, 13
    %v263 = vld [vmem:[%s1 + $0xd] sm:$0x1]
    %v264 = vsel %vm261, 1, 0
    %v265 = vsel %vm262, 1, 0
    %266 = vset.pattern.permute.xlu0 0
    %267 = vperm.xlu0 %266, %v264
    %v268 = vpop.permute.xlu0 %267
    %269 = vset.pattern.permute.xlu0 0
    %270 = vperm.xlu0 %269, %v265
    %v271 = vpop.permute.xlu0 %270
    %vm272 = vcmp.eq.s32.totalorder %v268, 1
    %vm273 = vcmp.eq.s32.totalorder %v271, 1
    %v274 = vlaneseq
    %v275 = vshrl.u32 %v274, 7
    %v276 = vsub.s32 0, %v275
    %v277 = vrot.slane %v263, %v276
    %v278 = vsel %vm272, %v277, %v259
    %v279 = vsel %vm273, %v277, %v260
    %vm280 = vcmp.eq.s32.totalorder %v12, 14
    %vm281 = vcmp.eq.s32.totalorder %v13, 14
    %v282 = vld [vmem:[%s1 + $0xe] sm:$0x1]
    %v283 = vsel %vm280, 1, 0
    %v284 = vsel %vm281, 1, 0
    %285 = vset.pattern.permute.xlu0 0
    %286 = vperm.xlu0 %285, %v283
    %v287 = vpop.permute.xlu0 %286
    %288 = vset.pattern.permute.xlu0 0
    %289 = vperm.xlu0 %288, %v284
    %v290 = vpop.permute.xlu0 %289
    %vm291 = vcmp.eq.s32.totalorder %v287, 1
    %vm292 = vcmp.eq.s32.totalorder %v290, 1
    %v293 = vlaneseq
    %v294 = vshrl.u32 %v293, 7
    %v295 = vsub.s32 0, %v294
    %v296 = vrot.slane %v282, %v295
    %v297 = vsel %vm291, %v296, %v278
    %v298 = vsel %vm292, %v296, %v279
    %vm299 = vcmp.eq.s32.totalorder %v12, 15
    %vm300 = vcmp.eq.s32.totalorder %v13, 15
    %v301 = vld [vmem:[%s1 + $0xf] sm:$0x1]
    %v302 = vsel %vm299, 1, 0
    %v303 = vsel %vm300, 1, 0
    %304 = vset.pattern.permute.xlu0 0
    %305 = vperm.xlu0 %304, %v302
    %v306 = vpop.permute.xlu0 %305
    %307 = vset.pattern.permute.xlu0 0
    %308 = vperm.xlu0 %307, %v303
    %v309 = vpop.permute.xlu0 %308
    %vm310 = vcmp.eq.s32.totalorder %v306, 1
    %vm311 = vcmp.eq.s32.totalorder %v309, 1
    %v312 = vlaneseq
    %v313 = vshrl.u32 %v312, 7
    %v314 = vsub.s32 0, %v313
    %v315 = vrot.slane %v301, %v314
    %v316 = vsel %vm310, %v315, %v297
    %v317 = vsel %vm311, %v315, %v298
    %318 = vst [vmem:[#allocation2] sm:$0xff] %v316
    %319 = vst [vmem:[#allocation2 + $0x8] sm:$0xff] %v317
    // Predicated region
    $region10: #{tpu_custom_call.1} parent=1 // pred_check
      _
    $region11: #{tpu_custom_call.1} parent=1 // pred_check_branch
      %321 = sbr.rel (0) target = $region13
    $region12: #{tpu_custom_call.1} parent=1 // pred_region
      %s323 = ssub.s32 256, 256
      %324 = vsyncadd [#allocation3], %s323
      %s325 = sshll.u32 [#allocation2], 4
      %s326 = int_to_ptr.vmem [resolvable:$true] %s325
      %331 = dma.vmem_to_hbm [thread:$0]  %s326, 256, %s2, [#allocation3], 128, 128, 8
    $region13: #{tpu_custom_call.1} parent=1 // pred_fallthru
      _
    // Predicated region
    $region14: #{tpu_custom_call.1} parent=1 // pred_check
      _
    $region15: #{tpu_custom_call.1} parent=1 // pred_check_branch
      %333 = sbr.rel (0) target = $region17
    $region16: #{tpu_custom_call.1} parent=1 // pred_region
      %334 = dma.done [#allocation3], 256
    $region17: #{tpu_custom_call.1} parent=1 // pred_fallthru
      _
    %335 = vsyncpa [#allocation3], 1

</llo_original>
